<compile_context>
chip_gen: v7x
topology: tpu7x:2x2x1
jax: 0.10.0
libtpu: 0.0.40
codegen_flags: <defaults>
</compile_context>

<pallas_src>
import jax
import jax.numpy as jnp
from jax.experimental import pallas as pl
from jax.experimental.pallas import tpu as pltpu


def _hw_down_kernel(x_ref, w_ref, shift_ref, o_ref):
    # x_ref: (1, tm, 4C)   w_ref: (4C, O)   shift_ref: (1, O)   o_ref: (1, O, tm)
    y = jnp.dot(x_ref[0], w_ref[...], preferred_element_type=jnp.float32)
    y = jnp.maximum(y + shift_ref[...], 0.0)       # fused conv-bias + BN + ReLU epilogue
    o_ref[0] = y.T.astype(o_ref.dtype)             # lane-dense (O, tm) store, NCHW direct


def hw_downsampling(x, w, bias, scale, shift, *, tile_m=512):
    """x: (B, C, H, W) NCHW.  w: (4, C, O) with w[g, c, o] == torch_weight[o, g*C + c, 0, 0]
    (g indexes [yL, yH0, yH1, yH2]).  scale/shift: pre-fused BatchNorm (eval mode).
    Returns (B, O, H//2, W//2)."""
    B, C, H, W = x.shape
    assert H % 2 == 0 and W % 2 == 0
    H2, W2 = H // 2, W // 2
    HW2 = H2 * W2
    O = w.shape[-1]

    # ---- offline folding (tiny tensors, negligible host-side cost) ----------------
    # corners of each 2x2 block: a=(0,0), b=(0,1), c=(1,0), d=(1,1)
    # Haar (J=1, 'haar', mode='zero', even dims): yL/yH rows in terms of the corners.
    T = jnp.array([[1,  1,  1,  1],     # yL
                   [1,  1, -1, -1],     # yH[...,0]
                   [1, -1,  1, -1],     # yH[...,1]
                   [1, -1, -1,  1]],    # yH[...,2]
                  dtype=jnp.float32)                                   # (g, corner)
    w_eff = 0.5 * jnp.einsum("gk,gco->kco", T, w.astype(jnp.float32))  # (corner, C, O)
    w_eff = (w_eff * scale[None, None, :]).reshape(4 * C, O).astype(x.dtype)
    shift_eff = (bias * scale + shift).reshape(1, O).astype(jnp.float32)

    # ---- regroup NCHW -> (B, H2*W2, 4C), corner-major / channel-minor -------------
    # TODO(synk): this regroup is a full HBM read+write done by XLA before the kernel;
    # accept NHWC upstream (regroup becomes a cheap reshape) or gather the 2x2 corners
    # with manual strided DMA inside the kernel to remove it.
    xr = x.reshape(B, C, H2, 2, W2, 2)
    xr = jnp.transpose(xr, (0, 2, 4, 3, 5, 1)).reshape(B, HW2, 4 * C)

    # ---- tiling ---------------------------------------------------------------------
    if HW2 <= tile_m:
        tm = HW2                                   # block == full dim: always legal
    else:
        tm = max(128, (tile_m // 128) * 128)       # multiple of 128 -> lane-dense store
    grid = (B, pl.cdiv(HW2, tm))

    itemsize = jnp.dtype(x.dtype).itemsize
    vmem_bytes = (2 * tm * 4 * C * itemsize        # double-buffered input block
                  + 2 * O * tm * itemsize          # double-buffered output block
                  + 4 * C * O * itemsize + O * 4   # resident weights + shift
                  + (4 << 20))                     # headroom for internal scratch
    vmem_limit = int(min(max(vmem_bytes, 32 << 20), 48 << 20))  # safe on v5e/v6e/v7x

    out = pl.pallas_call(
        _hw_down_kernel,
        out_shape=jax.ShapeDtypeStruct((B, O, HW2), x.dtype),
        grid=grid,
        in_specs=[
            pl.BlockSpec((1, tm, 4 * C), lambda b, i: (b, i, 0)),
            pl.BlockSpec((4 * C, O), lambda b, i: (0, 0)),
            pl.BlockSpec((1, O), lambda b, i: (0, 0)),
        ],
        out_specs=pl.BlockSpec((1, O, tm), lambda b, i: (b, 0, i)),
        compiler_params=pltpu.CompilerParams(
            dimension_semantics=("parallel", "parallel"),
            vmem_limit_bytes=vmem_limit),
    )(xr, w_eff, shift_eff)

    return out.reshape(B, O, H2, W2)               # already NCHW: free reshape


def reference(x, w, bias, scale, shift):
    """Pure-JAX reference of HWDownsampling.forward (BN in eval mode)."""
    B, C, H, W = x.shape
    O = w.shape[-1]
    a = x[:, :, 0::2, 0::2]
    b = x[:, :, 0::2, 1::2]
    c = x[:, :, 1::2, 0::2]
    d = x[:, :, 1::2, 1::2]
    yl = (a + b + c + d) * 0.5
    y0 = (a + b - c - d) * 0.5
    y1 = (a - b + c - d) * 0.5
    y2 = (a - b - c + d) * 0.5
    feat = jnp.concatenate([yl, y0, y1, y2], axis=1)           # (B, 4C, H/2, W/2)
    w2d = w.reshape(4 * C, O)                                   # k = g*C + c
    y = jnp.einsum("bkhw,ko->bohw", feat, w2d) + bias[None, :, None, None]
    y = y * scale[None, :, None, None] + shift[None, :, None, None]
    return jnp.maximum(y, 0.0)


def _make_params(key, C_in, C_out):
    k2, k3, k4, k5, k6, k7 = jax.random.split(key, 6)
    w = 0.1 * jax.random.normal(k2, (4, C_in, C_out), jnp.float32)
    bias = 0.1 * jax.random.normal(k3, (C_out,), jnp.float32)
    gamma = 1.0 + 0.1 * jax.random.normal(k4, (C_out,), jnp.float32)
    beta = 0.1 * jax.random.normal(k5, (C_out,), jnp.float32)
    running_mean = 0.1 * jax.random.normal(k6, (C_out,), jnp.float32)
    running_var = jnp.abs(jax.random.normal(k7, (C_out,), jnp.float32)) + 0.5
    eps = 1e-5
    scale = gamma / jnp.sqrt(running_var + eps)
    shift = beta - running_mean * scale
    return w, bias, scale, shift


if __name__ == "__main__":
    key = jax.random.PRNGKey(0)
    k_main, k_edge = jax.random.split(key)

    # --- main test: small shapes consistent with the module --------------------------
    B, C_in, H, W = 2, 4, 16, 16
    C_out = 8
    kx, kp = jax.random.split(k_main)
    x = jax.random.normal(kx, (B, C_in, H, W), jnp.float32)
    w, bias, scale, shift = _make_params(kp, C_in, C_out)

    out = jax.block_until_ready(hw_downsampling(x, w, bias, scale, shift))
    ref = reference(x, w, bias, scale, shift)
    assert out.shape == (B, C_out, H // 2, W // 2), out.shape
    assert jnp.allclose(out, ref, atol=2e-5, rtol=2e-5), float(
        jnp.max(jnp.abs(out - ref)))

    # --- edge-block test: H2*W2 not divisible by the tile (exercises cdiv grid +
    #     Pallas masking of out-of-bounds output rows, no input padding) --------------
    B2, C2, H2s, W2s, O2 = 1, 3, 70, 70, 16     # H2*W2 = 1225, tm = 512 -> 3 tiles
    kx2, kp2 = jax.random.split(k_edge)
    x2 = jax.random.normal(kx2, (B2, C2, H2s, W2s), jnp.float32)
    w2, bias2, scale2, shift2 = _make_params(kp2, C2, O2)

    out2 = jax.block_until_ready(
        hw_downsampling(x2, w2, bias2, scale2, shift2, tile_m=512))
    ref2 = reference(x2, w2, bias2, scale2, shift2)
    assert out2.shape == (B2, O2, H2s // 2, W2s // 2), out2.shape
    assert jnp.allclose(out2, ref2, atol=2e-5, rtol=2e-5), float(
        jnp.max(jnp.abs(out2 - ref2)))

    print("KERNEL_OK")
</pallas_src>

<mosaic_0001>
module attributes {stable_mosaic.version = 11 : i64} {
  func.func @_hw_down_kernel(%arg0: i32, %arg1: i32, %arg2: memref<1x64x16xf32, #tpu.memory_space<vmem>>, %arg3: memref<16x8xf32, #tpu.memory_space<vmem>>, %arg4: memref<1x8xf32, #tpu.memory_space<vmem>>, %arg5: memref<1x8x64xf32, #tpu.memory_space<vmem>>) attributes {dimension_semantics = [#tpu.dimension_semantics<parallel>, #tpu.dimension_semantics<parallel>], iteration_bounds = array<i64: 2, 1>, scalar_prefetch = 0 : i64, scratch_operands = 0 : i64, tpu.core_type = #tpu.core_type<tc>, window_params = [{transform_indices = @transform_0, window_bounds = array<i64: 1, 64, 16>}, {pipeline_mode = #tpu.pipeline_mode<synchronous>, transform_indices = @transform_1, window_bounds = array<i64: 16, 8>}, {pipeline_mode = #tpu.pipeline_mode<synchronous>, transform_indices = @transform_2, window_bounds = array<i64: 1, 8>}, {transform_indices = @transform_3, window_bounds = array<i64: 1, 8, 64>}]} {
    %c0 = arith.constant 0 : index
    %c0_0 = arith.constant 0 : index
    %c0_1 = arith.constant 0 : index
    %0 = vector.load %arg2[%c0, %c0_0, %c0_1] : memref<1x64x16xf32, #tpu.memory_space<vmem>>, vector<1x64x16xf32>
    %1 = vector.shape_cast %0 : vector<1x64x16xf32> to vector<64x16xf32>
    %c0_2 = arith.constant 0 : index
    %c0_3 = arith.constant 0 : index
    %2 = vector.load %arg3[%c0_2, %c0_3] : memref<16x8xf32, #tpu.memory_space<vmem>>, vector<16x8xf32>
    %cst = arith.constant dense<0.000000e+00> : vector<64x8xf32>
    %3 = tpu.matmul %1, %2, %cst {dimension_numbers = #tpu.dot_dimension_numbers<[1], [0], [0], [1], [0, 0, 1, 1], [], []>} : vector<64x16xf32>, vector<16x8xf32>, vector<64x8xf32> -> vector<64x8xf32>
    %c0_4 = arith.constant 0 : index
    %c0_5 = arith.constant 0 : index
    %4 = vector.load %arg4[%c0_4, %c0_5] : memref<1x8xf32, #tpu.memory_space<vmem>>, vector<1x8xf32>
    %5 = vector.broadcast %4 : vector<1x8xf32> to vector<64x8xf32>
    %6 = arith.addf %3, %5 : vector<64x8xf32>
    %cst_6 = arith.constant 0.000000e+00 : f32
    %7 = vector.broadcast %cst_6 : f32 to vector<64x8xf32>
    %8 = arith.maximumf %6, %7 : vector<64x8xf32>
    %9 = tpu.transpose %8, [1, 0] : vector<64x8xf32> -> vector<8x64xf32>
    %c0_7 = arith.constant 0 : index
    %c0_8 = arith.constant 0 : index
    %c0_9 = arith.constant 0 : index
    %10 = vector.load %arg5[%c0_7, %c0_8, %c0_9] : memref<1x8x64xf32, #tpu.memory_space<vmem>>, vector<1x8x64xf32>
    %11 = vector.shape_cast %10 : vector<1x8x64xf32> to vector<8x64xf32>
    %12 = vector.shape_cast %9 : vector<8x64xf32> to vector<1x8x64xf32>
    tpu.vector_store %arg5[%c0_7, %c0_8, %c0_9], %12 {strides = array<i32>} : memref<1x8x64xf32, #tpu.memory_space<vmem>>, vector<1x8x64xf32>,
    return
  }
  func.func @transform_0(%arg0: i32, %arg1: i32) -> (i32, i32, i32) {
    %c0_i32 = arith.constant 0 : i32
    %c0_i32_0 = arith.constant 0 : i32
    return %arg0, %arg1, %c0_i32 : i32, i32, i32
  }
  func.func @transform_1(%arg0: i32, %arg1: i32) -> (i32, i32) {
    %c0_i32 = arith.constant 0 : i32
    %c0_i32_0 = arith.constant 0 : i32
    %c0_i32_1 = arith.constant 0 : i32
    return %c0_i32, %c0_i32_0 : i32, i32
  }
  func.func @transform_2(%arg0: i32, %arg1: i32) -> (i32, i32) {
    %c0_i32 = arith.constant 0 : i32
    %c0_i32_0 = arith.constant 0 : i32
    %c0_i32_1 = arith.constant 0 : i32
    return %c0_i32, %c0_i32_0 : i32, i32
  }
  func.func @transform_3(%arg0: i32, %arg1: i32) -> (i32, i32, i32) {
    %c0_i32 = arith.constant 0 : i32
    %c0_i32_0 = arith.constant 0 : i32
    return %arg0, %c0_i32, %arg1 : i32, i32, i32
  }
}

</mosaic_0001>

<llo_original>
// kernel: tpu_custom_call.1
$region0: #{tpu_custom_call.1}
  #allocation0 [shape = 'u32[]', space=smem, size = 0x4, offset = 0x4, fixed_abs, tag = 'smem constant byte address 0x4 - core index']
  #allocation1 [shape = 'u32[144,128]{1,0:T(1,128)}', space=vmem, size = 0x12000, scoped, tag = 'internal scratch']
  %s0 = inlined_call_operand.vmem [shape: f32[2,64,16], index: 0, kind: input, shape index: {}]
  %s1 = inlined_call_operand.vmem [shape: f32[16,8], index: 1, kind: input, shape index: {}]
  %s2 = inlined_call_operand.vmem [shape: f32[1,8], index: 2, kind: input, shape index: {}]
  %s3 = inlined_call_operand.hbm [shape: f32[2,8,64], index: 3, kind: output, shape index: {}]
  %s4 = sld [smem:[#allocation0]]
  $region45: #{tpu_custom_call.1} parent=0
    _
  %s6 = ssub.s32 1, %s4
  %s7 = scalar_select 0, %s6, %s4
  $region1: #{tpu_custom_call.1} parent=0
    #allocation2 [shape = 'u8[8192]{0}', space=vmem, size = 0x2000, scoped, tag = 'output window, operand 0']
    #allocation3 [shape = 's32[2]{0}', space=sflag, size = 0x8, scoped, tag = 'scoped memory for tpu_custom_call.1']
    %8 = vsyncpa [#allocation3], 0
    %s9 = scalar_lea.sflag [#allocation3], 1
    %10 = vsyncpa %s9, 0
    loop: start=0, step=1, limit=4
    $region2: #{tpu_custom_call.1} parent=1 // loop_pre_header
      _
    $region3: #{tpu_custom_call.1} parent=1 // loop_header
      %s12 = sphi 0, %s16
      %p13 = scmp.ge.s32.totalorder %s12, 4
      %s19 = sphi 0, %s31
      %s20 = sphi 0, %s27
      %s21 = sphi 0, %s19
      %s22 = sphi 0, %s20
      %s23 = sphi 0, %s21
      %s24 = sphi 0, %s22
      %s36 = sphi 0, %s38
      %s39 = sphi 0, %s36
      %s40 = sphi 0, %s39
      %s56 = sphi 0, %s40
      %s60 = sphi 0, %s60
      %s62 = sphi 0, %s60
      %s63 = sphi 0, %s62
      %s77 = sphi 0, %s63
      %s81 = sphi 0, %s81
      %s83 = sphi 0, %s81
      %s84 = sphi 0, %s83
      %s98 = sphi 0, %s84
      %s106 = sphi 0, %s108
      %s109 = sphi 0, %s106
      %s110 = sphi 0, %s109
      %s126 = sphi 0, %s110
    $region4: #{tpu_custom_call.1} parent=1 // loop_header_branch
      %15 = sbr.rel (%p13) target = $region8
    $region5: #{tpu_custom_call.1} parent=1 // loop_body
      %s17 = ssub.s32 %s12, 1
      %s18 = ssub.s32 %s12, 2
      %s25 = sadd.s32 1, %s20
      %p26 = scmp.ge.s32.totalorder %s25, 1
      %s27 = scalar_select %p26, 0, %s25
      %s28 = sadd.s32 1, %s19
      %s29 = scalar_select %p26, %s28, %s19
      %p30 = scmp.ge.s32.totalorder %s29, 2
      %s31 = scalar_select %p30, 0, %s29
      %s32 = ssub.s32 %s19, %s31
      %s33 = ssub.s32 %s20, %s27
      %s34 = sor.u32 %s32, %s33
      %p35 = scmp.eq.s32.totalorder %s34, 0
      %s37 = sadd.s32 %s36, 1
      %s38 = scalar_select %p35, %s36, %s37
      %p41 = pneg %p35
      %p42 = scmp.eq.s32.totalorder %s12, 1
      %p43 = por %p41, %p42
      %p44 = scmp.ne.s32.totalorder %s36, %s39
      %p45 = scmp.eq.s32.totalorder %s12, 0
      %p46 = por %p44, %p45
      %p47 = scmp.ne.s32.totalorder %s36, %s39
      %p48 = scmp.eq.s32.totalorder %s17, 1
      %p49 = por %p47, %p48
      %p50 = scmp.ne.s32.totalorder %s39, %s40
      %p51 = scmp.eq.s32.totalorder %s17, 0
      %p52 = por %p50, %p51
      %p53 = scmp.ne.s32.totalorder %s39, %s40
      %p54 = scmp.eq.s32.totalorder %s18, 1
      %p55 = por %p53, %p54
      %p57 = scmp.ne.s32.totalorder %s40, %s56
      %p58 = scmp.eq.s32.totalorder %s18, 0
      %p59 = por %p57, %p58
      %s61 = sadd.s32 %s60, 1
      %p64 = scmp.eq.s32.totalorder %s12, 1
      %p65 = scmp.ne.s32.totalorder %s60, %s62
      %p66 = scmp.eq.s32.totalorder %s12, 0
      %p67 = por %p65, %p66
      %p68 = scmp.ne.s32.totalorder %s60, %s62
      %p69 = scmp.eq.s32.totalorder %s17, 1
      %p70 = por %p68, %p69
      %p71 = scmp.ne.s32.totalorder %s62, %s63
      %p72 = scmp.eq.s32.totalorder %s17, 0
      %p73 = por %p71, %p72
      %p74 = scmp.ne.s32.totalorder %s62, %s63
      %p75 = scmp.eq.s32.totalorder %s18, 1
      %p76 = por %p74, %p75
      %p78 = scmp.ne.s32.totalorder %s63, %s77
      %p79 = scmp.eq.s32.totalorder %s18, 0
      %p80 = por %p78, %p79
      %s82 = sadd.s32 %s81, 1
      %p85 = scmp.eq.s32.totalorder %s12, 1
      %p86 = scmp.ne.s32.totalorder %s81, %s83
      %p87 = scmp.eq.s32.totalorder %s12, 0
      %p88 = por %p86, %p87
      %p89 = scmp.ne.s32.totalorder %s81, %s83
      %p90 = scmp.eq.s32.totalorder %s17, 1
      %p91 = por %p89, %p90
      %p92 = scmp.ne.s32.totalorder %s83, %s84
      %p93 = scmp.eq.s32.totalorder %s17, 0
      %p94 = por %p92, %p93
      %p95 = scmp.ne.s32.totalorder %s83, %s84
      %p96 = scmp.eq.s32.totalorder %s18, 1
      %p97 = por %p95, %p96
      %p99 = scmp.ne.s32.totalorder %s84, %s98
      %p100 = scmp.eq.s32.totalorder %s18, 0
      %p101 = por %p99, %p100
      %s102 = ssub.s32 %s19, %s31
      %s103 = ssub.s32 %s20, %s27
      %s104 = sor.u32 %s102, %s103
      %p105 = scmp.eq.s32.totalorder %s104, 0
      %s107 = sadd.s32 %s106, 1
      %s108 = scalar_select %p105, %s106, %s107
      %p111 = pneg %p105
      %p112 = scmp.eq.s32.totalorder %s12, 1
      %p113 = por %p111, %p112
      %p114 = scmp.ne.s32.totalorder %s106, %s109
      %p115 = scmp.eq.s32.totalorder %s12, 0
      %p116 = por %p114, %p115
      %p117 = scmp.ne.s32.totalorder %s106, %s109
      %p118 = scmp.eq.s32.totalorder %s17, 1
      %p119 = por %p117, %p118
      %p120 = scmp.ne.s32.totalorder %s109, %s110
      %p121 = scmp.eq.s32.totalorder %s17, 0
      %p122 = por %p120, %p121
      %p123 = scmp.ne.s32.totalorder %s109, %s110
      %p124 = scmp.eq.s32.totalorder %s18, 1
      %p125 = por %p123, %p124
      %p127 = scmp.ne.s32.totalorder %s110, %s126
      %p128 = scmp.eq.s32.totalorder %s18, 0
      %p129 = por %p127, %p128
      %p130 = scmp.le.s32.totalorder 1, %s12
      %p131 = scmp.lt.s32.totalorder %s12, 3
      %p132 = pnand %p130, %p131
      %p133 = pneg %p132
      // Predicated region
      $region9: #{tpu_custom_call.1} parent=5 // pred_check
        _
      $region10: #{tpu_custom_call.1} parent=5 // pred_check_branch
        %135 = sbr.rel (%p132) target = $region12
      $region11: #{tpu_custom_call.1} parent=5 // pred_region
        %s136 = ssub.s32 %s12, 1
        // Predicated region
        $region13: #{tpu_custom_call.1} parent=11 // pred_check
          %p137 = pneg %p73
        $region14: #{tpu_custom_call.1} parent=11 // pred_check_branch
          %139 = sbr.rel (%p137) target = $region16
        $region15: #{tpu_custom_call.1} parent=11 // pred_region
          _
        $region16: #{tpu_custom_call.1} parent=11 // pred_fallthru
          _
        // Predicated region
        $region17: #{tpu_custom_call.1} parent=11 // pred_check
          %p140 = pneg %p94
        $region18: #{tpu_custom_call.1} parent=11 // pred_check_branch
          %142 = sbr.rel (%p140) target = $region20
        $region19: #{tpu_custom_call.1} parent=11 // pred_region
          _
        $region20: #{tpu_custom_call.1} parent=11 // pred_fallthru
          _
      $region12: #{tpu_custom_call.1} parent=5 // pred_fallthru
        _
      %p143 = scmp.lt.s32.totalorder %s12, 2
      // Predicated region
      $region21: #{tpu_custom_call.1} parent=5 // pred_check
        %p144 = pneg %p143
      $region22: #{tpu_custom_call.1} parent=5 // pred_check_branch
        %146 = sbr.rel (%p144) target = $region24
      $region23: #{tpu_custom_call.1} parent=5 // pred_region
        // Predicated region
        $region25: #{tpu_custom_call.1} parent=23 // pred_check
          %p147 = pneg %p46
        $region26: #{tpu_custom_call.1} parent=23 // pred_check_branch
          %149 = sbr.rel (%p147) target = $region28
        $region27: #{tpu_custom_call.1} parent=23 // pred_region
          %s150 = smul.u32 8, %s20
          %p151 = scmp.lt.s32.totalorder %s19, 1
          %s152 = scalar_select %p151, %s19, 1
          %p153 = scmp.lt.s32.totalorder %s150, 7
          %s154 = scalar_select %p153, %s150, 7
          %s155 = smul.addr %s152, 8
          %s156 = sadd.s32 %s154, %s155
          %s157 = smul.addr %s156, 8
          %s158 = scalar_lea.vmem %s0, %s157
          %s159 = smul.u32 8, %s20
        $region28: #{tpu_custom_call.1} parent=23 // pred_fallthru
          _
      $region24: #{tpu_custom_call.1} parent=5 // pred_fallthru
        _
      %p160 = scmp.le.s32.totalorder 1, %s12
      %p161 = scmp.lt.s32.totalorder %s12, 3
      %p162 = pnand %p160, %p161
      %p163 = pneg %p162
      // Predicated region
      $region29: #{tpu_custom_call.1} parent=5 // pred_check
        _
      $region30: #{tpu_custom_call.1} parent=5 // pred_check_branch
        %165 = sbr.rel (%p162) target = $region32
      $region31: #{tpu_custom_call.1} parent=5 // pred_region
        %s166 = ssub.s32 %s12, 1
        %s167 = smul.u32 8, %s22
        %p168 = scmp.lt.s32.totalorder %s21, 1
        %s169 = scalar_select %p168, %s21, 1
        %p170 = scmp.lt.s32.totalorder %s167, 7
        %s171 = scalar_select %p170, %s167, 7
        %s172 = smul.addr %s169, 8
        %s173 = sadd.s32 %s171, %s172
        %s174 = smul.addr %s173, 8
        %s175 = scalar_lea.vmem %s0, %s174
        %p176 = pneg %p52
        %p177 = pneg %p49
        %p178 = pneg %p73
        %p179 = pneg %p70
        %p180 = pneg %p94
        %p181 = pneg %p91
        %p182 = pneg %p122
        %p183 = pneg %p119
        %s184 = sand.u32 %s109, 1
        %s185 = scalar_lea.sflag [#allocation3], %s184
        %s186 = sand.u32 %s109, 1
        %s187 = smul.addr %s186, 8
        %s188 = scalar_lea.vmem [#allocation2], %s187
        %s189 = smul.u32 8, %s22
        %p190 = scmp.lt.s32.totalorder %s21, 1
        %s191 = scalar_select %p190, %s21, 1
        %p192 = scmp.lt.s32.totalorder %s189, 7
        %s193 = scalar_select %p192, %s189, 7
        %s194 = smul.addr %s191, 8
        %s195 = sadd.s32 %s193, %s194
        %s196 = smul.addr %s195, 8
        %s197 = scalar_lea.vmem %s0, %s196
        %s198 = smul.u32 8, %s22
        %v199 = vld [vmem:[%s197] sm:$0xff]
        %v200 = vld [vmem:[%s197 + $0x8] sm:$0xff]
        %v201 = vld [vmem:[%s197 + $0x10] sm:$0xff]
        %v202 = vld [vmem:[%s197 + $0x18] sm:$0xff]
        %v203 = vld [vmem:[%s197 + $0x20] sm:$0xff]
        %v204 = vld [vmem:[%s197 + $0x28] sm:$0xff]
        %v205 = vld [vmem:[%s197 + $0x30] sm:$0xff]
        %v206 = vld [vmem:[%s197 + $0x38] sm:$0xff]
        %v207 = vld [vmem:[%s1] sm:$0xff]
        %v208 = vld [vmem:[%s1 + $0x8] sm:$0xff]
        %v209 = vld [vmem:[%s2] sm:$0x1]
        %v211 = vlaneseq
        %v212 = vshrl.u32 %v211, 7
        %v213 = vsub.s32 0, %v212
        %v214 = vrot.slane %v209, %v213
        %vm216 = vcmask 130048
        %v218 = vsel %vm216, %v199, 0
        %v221 = vsel %vm216, %v200, 0
        %v224 = vsel %vm216, %v201, 0
        %v227 = vsel %vm216, %v202, 0
        %v230 = vsel %vm216, %v203, 0
        %v233 = vsel %vm216, %v204, 0
        %v236 = vsel %vm216, %v205, 0
        %v239 = vsel %vm216, %v206, 0
        %241 = vmatprep.subr.mxu0 0.0
        %242 = vmatpush1.msra.mxu0 %v207
        %243 = vmatprep.subr.mxu0 0.0
        %244 = vmatpush1.msra.mxu0 %v208
        %245 = vmatprep.subr.mxu0 0.0
        %246 = vmatpush1.msra.mxu0 0.0
        %247 = vmatprep.subr.mxu0 0.0
        %248 = vmatpush1.msra.mxu0 0.0
        %249 = vmatprep.subr.mxu0 0.0
        %250 = vmatpush1.msra.mxu0 0.0
        %251 = vmatprep.subr.mxu0 0.0
        %252 = vmatpush1.msra.mxu0 0.0
        %253 = vmatprep.subr.mxu0 0.0
        %254 = vmatpush1.msra.mxu0 0.0
        %255 = vmatprep.subr.mxu0 0.0
        %256 = vmatpush1.msra.mxu0 0.0
        %257 = vmatprep.subr.mxu0 0.0
        %258 = vmatpush1.msra.mxu0 0.0
        %259 = vmatprep.subr.mxu0 0.0
        %260 = vmatpush1.msra.mxu0 0.0
        %261 = vmatprep.subr.mxu0 0.0
        %262 = vmatpush1.msra.mxu0 0.0
        %263 = vmatprep.subr.mxu0 0.0
        %264 = vmatpush1.msra.mxu0 0.0
        %265 = vmatprep.subr.mxu0 0.0
        %266 = vmatpush1.msra.mxu0 0.0
        %267 = vmatprep.subr.mxu0 0.0
        %268 = vmatpush1.msra.mxu0 0.0
        %269 = vmatprep.subr.mxu0 0.0
        %270 = vmatpush1.msra.mxu0 0.0
        %271 = vmatprep.subr.mxu0 0.0
        %272 = vmatpush1.msra.mxu0 0.0
        %273 = vmatprep.subr.mxu0 0.0
        %274 = vmatpush1.msra.mxu0 0.0
        %275 = vmatprep.subr.mxu0 0.0
        %276 = vmatpush1.msra.mxu0 0.0
        %277 = vmatprep.subr.mxu0 0.0
        %278 = vmatpush1.msra.mxu0 0.0
        %279 = vmatprep.subr.mxu0 0.0
        %280 = vmatpush1.msra.mxu0 0.0
        %281 = vmatprep.subr.mxu0 0.0
        %282 = vmatpush1.msra.mxu0 0.0
        %283 = vmatprep.subr.mxu0 0.0
        %284 = vmatpush1.msra.mxu0 0.0
        %285 = vmatprep.subr.mxu0 0.0
        %286 = vmatpush1.msra.mxu0 0.0
        %287 = vmatprep.subr.mxu0 0.0
        %288 = vmatpush1.msra.mxu0 0.0
        %289 = vmatprep.subr.mxu0 0.0
        %290 = vmatpush1.msra.mxu0 0.0
        %291 = vmatprep.subr.mxu0 0.0
        %292 = vmatpush1.msra.mxu0 0.0
        %293 = vmatprep.subr.mxu0 0.0
        %294 = vmatpush1.msra.mxu0 0.0
        %295 = vmatprep.subr.mxu0 0.0
        %296 = vmatpush1.msra.mxu0 0.0
        %297 = vmatprep.subr.mxu0 0.0
        %298 = vmatpush1.msra.mxu0 0.0
        %299 = vmatprep.subr.mxu0 0.0
        %300 = vmatpush1.msra.mxu0 0.0
        %301 = vmatprep.subr.mxu0 0.0
        %302 = vmatpush1.msra.mxu0 0.0
        %303 = vmatprep.subr.mxu0 0.0
        %304 = vmatpush1.msra.mxu0 0.0
        %305 = vmatprep.mubr.f32.mxu0 0.0
        %306 = vmatmul.mubr.f32.gmra.mrb[0].mxu0 %v218
        %v307 = vpop.f32.mrb[0].mxu0
        %v308 = vadd.f32 %v214, %v307
        %v309 = vpop.f32.mrb[0].mxu0
        %310 = vmatprep.mubr.f32.mxu0 0.0
        %311 = vmatmul.mubr.f32.gmra.mrb[0].mxu0 %v221
        %v312 = vpop.f32.mrb[0].mxu0
        %v313 = vadd.f32 %v214, %v312
        %v314 = vpop.f32.mrb[0].mxu0
        %315 = vmatprep.mubr.f32.mxu0 0.0
        %316 = vmatmul.mubr.f32.gmra.mrb[0].mxu0 %v224
        %v317 = vpop.f32.mrb[0].mxu0
        %v318 = vadd.f32 %v214, %v317
        %v319 = vpop.f32.mrb[0].mxu0
        %320 = vmatprep.mubr.f32.mxu0 0.0
        %321 = vmatmul.mubr.f32.gmra.mrb[0].mxu0 %v227
        %v322 = vpop.f32.mrb[0].mxu0
        %v323 = vadd.f32 %v214, %v322
        %v324 = vpop.f32.mrb[0].mxu0
        %325 = vmatprep.mubr.f32.mxu0 0.0
        %326 = vmatmul.mubr.f32.gmra.mrb[0].mxu0 %v230
        %v327 = vpop.f32.mrb[0].mxu0
        %v328 = vadd.f32 %v214, %v327
        %v329 = vpop.f32.mrb[0].mxu0
        %330 = vmatprep.mubr.f32.mxu0 0.0
        %331 = vmatmul.mubr.f32.gmra.mrb[0].mxu0 %v233
        %v332 = vpop.f32.mrb[0].mxu0
        %v333 = vadd.f32 %v214, %v332
        %v334 = vpop.f32.mrb[0].mxu0
        %335 = vmatprep.mubr.f32.mxu0 0.0
        %336 = vmatmul.mubr.f32.gmra.mrb[0].mxu0 %v236
        %v337 = vpop.f32.mrb[0].mxu0
        %v338 = vadd.f32 %v214, %v337
        %v339 = vpop.f32.mrb[0].mxu0
        %340 = vmatprep.mubr.f32.mxu0 0.0
        %341 = vmatmul.mubr.f32.gmra.mrb[0].mxu0 %v239
        %v342 = vpop.f32.mrb[0].mxu0
        %v343 = vadd.f32 %v214, %v342
        %v344 = vpop.f32.mrb[0].mxu0
        %345 = vdwg.mxu0
        %v346 = vmax.f32 %v308, 0.0
        %v347 = vmax.f32 %v313, 0.0
        %v348 = vmax.f32 %v318, 0.0
        %v349 = vmax.f32 %v323, 0.0
        %v350 = vmax.f32 %v328, 0.0
        %v351 = vmax.f32 %v333, 0.0
        %v352 = vmax.f32 %v338, 0.0
        %v353 = vmax.f32 %v343, 0.0
        %354 = vxpose.xlu0.b32.start [1/16] %v346, 128
        %355 = vxpose.xlu0.b32.cont [2/16] %v347, 128
        %356 = vxpose.xlu0.b32.cont [3/16] %v348, 128
        %357 = vxpose.xlu0.b32.cont [4/16] %v349, 128
        %358 = vxpose.xlu0.b32.cont [5/16] %v350, 128
        %359 = vxpose.xlu0.b32.cont [6/16] %v351, 128
        %360 = vxpose.xlu0.b32.cont [7/16] %v352, 128
        %361 = vxpose.xlu0.b32.cont [8/16] %v353, 128
        %362 = vxpose.xlu0.b32.cont [9/16] 0.0, 128
        %363 = vxpose.xlu0.b32.cont [10/16] 0.0, 128
        %364 = vxpose.xlu0.b32.cont [11/16] 0.0, 128
        %365 = vxpose.xlu0.b32.cont [12/16] 0.0, 128
        %366 = vxpose.xlu0.b32.cont [13/16] 0.0, 128
        %367 = vxpose.xlu0.b32.cont [14/16] 0.0, 128
        %368 = vxpose.xlu0.b32.cont [15/16] 0.0, 128
        %369 = vxpose.xlu0.b32.end [16/16] 0.0, 128
        %v370 = vpop.trf.xlu0
        %v371 = vpop.trf.xlu0
        %v372 = vpop.trf.xlu0
        %v373 = vpop.trf.xlu0
        %v374 = vpop.trf.xlu0
        %v375 = vpop.trf.xlu0
        %v376 = vpop.trf.xlu0
        %v377 = vpop.trf.xlu0
        %v378 = vpop.trf.xlu0
        %v379 = vpop.trf.xlu0
        %v380 = vpop.trf.xlu0
        %v381 = vpop.trf.xlu0
        %v382 = vpop.trf.xlu0
        %v383 = vpop.trf.xlu0
        %v384 = vpop.trf.xlu0
        %v385 = vpop.trf.xlu0
        %vm386 = vcmask 523264
        %387 = vst.msk [vmem:[%s188] sm:$0xff] %vm386, %v370
        %s388 = sand.u32 %s109, 1
        %s389 = scalar_lea.sflag [#allocation3], %s388
        %s390 = sand.u32 %s109, 1
        %s391 = smul.addr %s390, 8
        %s392 = scalar_lea.vmem [#allocation2], %s391
        // Predicated region
        $region33: #{tpu_custom_call.1} parent=31 // pred_check
          %p393 = pneg %p119
        $region34: #{tpu_custom_call.1} parent=31 // pred_check_branch
          %395 = sbr.rel (%p393) target = $region36
        $region35: #{tpu_custom_call.1} parent=31 // pred_region
          %s397 = ssub.s32 128, 128
          %398 = vsyncadd %s389, %s397
          %s399 = sadd.s32 %s22, %s21
          %s400 = smul.addr %s399, 128
          %s401 = scalar_lea.hbm %s3, %s400
          %s403 = sshll.u32 %s392, 4
          %s404 = int_to_ptr.vmem [resolvable:$true] %s403
          %406 = dma.vmem_to_hbm [thread:$0]  %s404, 128, %s401, %s389
        $region36: #{tpu_custom_call.1} parent=31 // pred_fallthru
          _
      $region32: #{tpu_custom_call.1} parent=5 // pred_fallthru
        _
      %p407 = scmp.le.s32.totalorder 2, %s12
      // Predicated region
      $region37: #{tpu_custom_call.1} parent=5 // pred_check
        %p408 = pneg %p407
      $region38: #{tpu_custom_call.1} parent=5 // pred_check_branch
        %410 = sbr.rel (%p408) target = $region40
      $region39: #{tpu_custom_call.1} parent=5 // pred_region
        %s411 = ssub.s32 %s12, 2
        // Predicated region
        $region41: #{tpu_custom_call.1} parent=39 // pred_check
          %p412 = pneg %p125
        $region42: #{tpu_custom_call.1} parent=39 // pred_check_branch
          %414 = sbr.rel (%p412) target = $region44
        $region43: #{tpu_custom_call.1} parent=39 // pred_region
          %s415 = sand.u32 %s110, 1
          %s416 = scalar_lea.sflag [#allocation3], %s415
          %s417 = sand.u32 %s110, 1
          %s418 = smul.addr %s417, 8
          %s419 = scalar_lea.vmem [#allocation2], %s418
          %420 = dma.done %s416, 128
        $region44: #{tpu_custom_call.1} parent=39 // pred_fallthru
          _
      $region40: #{tpu_custom_call.1} parent=5 // pred_fallthru
        _
    $region6: #{tpu_custom_call.1} parent=1 // loop_footer
      %s16 = sadd.s32 1, %s12
    $region7: #{tpu_custom_call.1} parent=1 // loop_footer_branch
      %11 = sbr.rel target = $region3
    $region8: #{tpu_custom_call.1} parent=1 // loop_exit
      _
    %421 = vsyncpa [#allocation3], 1
    %s422 = scalar_lea.sflag [#allocation3], 1
    %423 = vsyncpa %s422, 1

</llo_original>
